<compile_context>
chip_gen: v7x
topology: tpu7x:2x2x1
jax: 0.10.0
libtpu: 0.0.40
codegen_flags: <defaults>
</compile_context>

<pallas_src>
import math
import jax
import jax.numpy as jnp
from jax.experimental import pallas as pl
from jax.experimental.pallas import tpu as pltpu


def _actor_kernel(si_ref, sa_ref, w1i_ref, w1s_ref, b1_ref,
                  w2_ref, b2_ref, w3_ref, b3_ref, o_ref):
    # si_ref: (TB, C*H*W) f32      sa_ref: (TB, state_dim) f32
    # w*_ref: (in, out) bf16       b*_ref: (1, out) f32
    # o_ref : (TB, action_dim) f32
    si = si_ref[...].astype(jnp.bfloat16)
    sa = sa_ref[...].astype(jnp.bfloat16)

    # layer 1: fused "concat" = sum of two partial matmuls, f32 accumulation
    h1 = (jnp.dot(si, w1i_ref[...], preferred_element_type=jnp.float32)
          + jnp.dot(sa, w1s_ref[...], preferred_element_type=jnp.float32)
          + b1_ref[...])
    h1 = jnp.maximum(h1, 0.0)                                   # ReLU (f32, VPU)

    # layer 2
    h2 = jnp.dot(h1.astype(jnp.bfloat16), w2_ref[...],
                 preferred_element_type=jnp.float32) + b2_ref[...]
    h2 = jnp.maximum(h2, 0.0)                                   # ReLU (f32, VPU)

    # layer 3 + tanh
    a = jnp.dot(h2.astype(jnp.bfloat16), w3_ref[...],
                preferred_element_type=jnp.float32) + b3_ref[...]
    o_ref[...] = jnp.tanh(a).astype(o_ref.dtype)                # Tanh (f32, EUP)


def actor_forward(s, s_a, params):
    """s: (B, C, H, W) float32, s_a: (B, state_dim) float32 -> (B, action_dim)."""
    b = s.shape[0]
    s_img = s.reshape(b, -1)                  # row-major flatten == torch .view(b, -1)
    w1i, w1s, b1, w2, b2, w3, b3 = params
    d_img = s_img.shape[1]
    d_state = s_a.shape[1]
    hidden = w1i.shape[1]
    action_dim = w3.shape[1]

    # Batch tile: whole batch when small (block == full dim is always legal),
    # 128-row tiles (multiple of 8 sublanes, f32) once the batch grows.
    TB = b if b <= 128 else 128
    grid = (pl.cdiv(b, TB),)

    # Activations/output walk the batch grid; weights/biases stay VMEM-resident
    # (constant block index -> never re-DMA'd across batch tiles).
    batch_spec = lambda cols: pl.BlockSpec((TB, cols), lambda i: (i, 0))
    const_spec = lambda shape: pl.BlockSpec(shape, lambda i: (0, 0))

    out = pl.pallas_call(
        _actor_kernel,
        out_shape=jax.ShapeDtypeStruct((b, action_dim), jnp.float32),
        grid=grid,
        in_specs=[
            batch_spec(d_img),                      # s_img
            batch_spec(d_state),                    # s_a
            const_spec((d_img, hidden)),            # w1_img  (bf16)
            const_spec((d_state, hidden)),          # w1_state(bf16)
            const_spec((1, hidden)),                # b1      (f32)
            const_spec((hidden, hidden)),           # w2      (bf16)
            const_spec((1, hidden)),                # b2      (f32)
            const_spec((hidden, action_dim)),       # w3      (bf16)
            const_spec((1, action_dim)),            # b3      (f32)
        ],
        out_specs=batch_spec(action_dim),
        compiler_params=pltpu.CompilerParams(
            dimension_semantics=("parallel",)),
    )(s_img, s_a, w1i, w1s, b1, w2, b2, w3, b3)
    return out


def init_actor_params(key, input_shape, state_dim, action_dim, hidden_dim,
                      w_dtype=jnp.bfloat16):
    """Mimics nn.Linear default init (U[-1/sqrt(fan_in), +1/sqrt(fan_in)]).

    layer_1's weight is generated as one (d_img + state_dim, hidden) matrix
    (so fan_in / semantics match the PyTorch module) and then split into the
    image part and the state part for the fused-concat kernel.
    Weights are stored bf16 (MXU operands); biases stay f32.
    """
    d_img = int(math.prod(input_shape))
    d_in = state_dim + d_img
    ks = jax.random.split(key, 6)

    def linear(kw, kb, fan_in, fan_out):
        bound = 1.0 / math.sqrt(fan_in)
        w = jax.random.uniform(kw, (fan_in, fan_out), jnp.float32, -bound, bound)
        bvec = jax.random.uniform(kb, (1, fan_out), jnp.float32, -bound, bound)
        return w, bvec

    w1, b1 = linear(ks[0], ks[1], d_in, hidden_dim)
    w1_img = w1[:d_img].astype(w_dtype)        # corresponds to s.view(b,-1) part
    w1_state = w1[d_img:].astype(w_dtype)      # corresponds to s_a part
    w2, b2 = linear(ks[2], ks[3], hidden_dim, hidden_dim)
    w3, b3 = linear(ks[4], ks[5], hidden_dim, action_dim)
    return (w1_img, w1_state, b1,
            w2.astype(w_dtype), b2,
            w3.astype(w_dtype), b3)


if __name__ == "__main__":
    key = jax.random.PRNGKey(0)
    k_s, k_sa, k_p = jax.random.split(key, 3)

    # Small shapes consistent with Actor.forward:
    B = 2
    input_shape = (4, 16, 16)     # (C, H, W) -> prod = 1024
    state_dim = 8
    action_dim = 4
    hidden_dim = 32

    s = jax.random.normal(k_s, (B,) + input_shape, jnp.float32)      # NCHW
    s_a = jax.random.normal(k_sa, (B, state_dim), jnp.float32)
    params = init_actor_params(k_p, input_shape, state_dim, action_dim, hidden_dim)

    a = actor_forward(s, s_a, params)
    jax.block_until_ready(a)
    assert a.shape == (B, action_dim)

    # Reference 1: same bf16-operand / f32-accumulate path in pure JAX.
    w1i, w1s, b1, w2, b2, w3, b3 = params
    si = s.reshape(B, -1)
    h1 = jnp.maximum(
        jnp.dot(si.astype(jnp.bfloat16), w1i, preferred_element_type=jnp.float32)
        + jnp.dot(s_a.astype(jnp.bfloat16), w1s, preferred_element_type=jnp.float32)
        + b1, 0.0)
    h2 = jnp.maximum(
        jnp.dot(h1.astype(jnp.bfloat16), w2, preferred_element_type=jnp.float32)
        + b2, 0.0)
    ref_bf16 = jnp.tanh(
        jnp.dot(h2.astype(jnp.bfloat16), w3, preferred_element_type=jnp.float32)
        + b3)
    assert jnp.allclose(a, ref_bf16, atol=1e-2, rtol=1e-2)

    # Reference 2: full-f32 math (PyTorch semantics), looser tolerance (bf16 weights).
    w1_full = jnp.concatenate([w1i.astype(jnp.float32), w1s.astype(jnp.float32)], axis=0)
    x = jnp.concatenate((si, s_a), axis=1)
    h1f = jnp.maximum(x @ w1_full + b1, 0.0)
    h2f = jnp.maximum(h1f @ w2.astype(jnp.float32) + b2, 0.0)
    ref_f32 = jnp.tanh(h2f @ w3.astype(jnp.float32) + b3)
    assert jnp.allclose(a, ref_f32, atol=5e-2, rtol=5e-2)

    print("KERNEL_OK")
</pallas_src>

<mosaic_0001>
module attributes {stable_mosaic.version = 11 : i64} {
  func.func @_actor_kernel(%arg0: i32, %arg1: memref<2x1024xf32, #tpu.memory_space<vmem>>, %arg2: memref<2x8xf32, #tpu.memory_space<vmem>>, %arg3: memref<1024x32xbf16, #tpu.memory_space<vmem>>, %arg4: memref<8x32xbf16, #tpu.memory_space<vmem>>, %arg5: memref<1x32xf32, #tpu.memory_space<vmem>>, %arg6: memref<32x32xbf16, #tpu.memory_space<vmem>>, %arg7: memref<1x32xf32, #tpu.memory_space<vmem>>, %arg8: memref<32x4xbf16, #tpu.memory_space<vmem>>, %arg9: memref<1x4xf32, #tpu.memory_space<vmem>>, %arg10: memref<2x4xf32, #tpu.memory_space<vmem>>) attributes {dimension_semantics = [#tpu.dimension_semantics<parallel>], iteration_bounds = array<i64: 1>, scalar_prefetch = 0 : i64, scratch_operands = 0 : i64, tpu.core_type = #tpu.core_type<tc>, window_params = [{transform_indices = @transform_0, window_bounds = array<i64: 2, 1024>}, {transform_indices = @transform_1, window_bounds = array<i64: 2, 8>}, {pipeline_mode = #tpu.pipeline_mode<synchronous>, transform_indices = @transform_2, window_bounds = array<i64: 1024, 32>}, {pipeline_mode = #tpu.pipeline_mode<synchronous>, transform_indices = @transform_3, window_bounds = array<i64: 8, 32>}, {pipeline_mode = #tpu.pipeline_mode<synchronous>, transform_indices = @transform_4, window_bounds = array<i64: 1, 32>}, {pipeline_mode = #tpu.pipeline_mode<synchronous>, transform_indices = @transform_5, window_bounds = array<i64: 32, 32>}, {pipeline_mode = #tpu.pipeline_mode<synchronous>, transform_indices = @transform_6, window_bounds = array<i64: 1, 32>}, {pipeline_mode = #tpu.pipeline_mode<synchronous>, transform_indices = @transform_7, window_bounds = array<i64: 32, 4>}, {pipeline_mode = #tpu.pipeline_mode<synchronous>, transform_indices = @transform_8, window_bounds = array<i64: 1, 4>}, {transform_indices = @transform_9, window_bounds = array<i64: 2, 4>}]} {
    %c0 = arith.constant 0 : index
    %c0_0 = arith.constant 0 : index
    %0 = vector.load %arg1[%c0, %c0_0] : memref<2x1024xf32, #tpu.memory_space<vmem>>, vector<2x1024xf32>
    %1 = arith.truncf %0 : vector<2x1024xf32> to vector<2x1024xbf16>
    %c0_1 = arith.constant 0 : index
    %c0_2 = arith.constant 0 : index
    %2 = vector.load %arg2[%c0_1, %c0_2] : memref<2x8xf32, #tpu.memory_space<vmem>>, vector<2x8xf32>
    %3 = arith.truncf %2 : vector<2x8xf32> to vector<2x8xbf16>
    %c0_3 = arith.constant 0 : index
    %c0_4 = arith.constant 0 : index
    %4 = vector.load %arg3[%c0_3, %c0_4] : memref<1024x32xbf16, #tpu.memory_space<vmem>>, vector<1024x32xbf16>
    %cst = arith.constant dense<0.000000e+00> : vector<2x32xf32>
    %5 = tpu.matmul %1, %4, %cst {dimension_numbers = #tpu.dot_dimension_numbers<[1], [0], [0], [1], [0, 0, 1, 1], [], []>} : vector<2x1024xbf16>, vector<1024x32xbf16>, vector<2x32xf32> -> vector<2x32xf32>
    %c0_5 = arith.constant 0 : index
    %c0_6 = arith.constant 0 : index
    %6 = vector.load %arg4[%c0_5, %c0_6] : memref<8x32xbf16, #tpu.memory_space<vmem>>, vector<8x32xbf16>
    %cst_7 = arith.constant dense<0.000000e+00> : vector<2x32xf32>
    %7 = tpu.matmul %3, %6, %cst_7 {dimension_numbers = #tpu.dot_dimension_numbers<[1], [0], [0], [1], [0, 0, 1, 1], [], []>} : vector<2x8xbf16>, vector<8x32xbf16>, vector<2x32xf32> -> vector<2x32xf32>
    %8 = arith.addf %5, %7 : vector<2x32xf32>
    %c0_8 = arith.constant 0 : index
    %c0_9 = arith.constant 0 : index
    %9 = vector.load %arg5[%c0_8, %c0_9] : memref<1x32xf32, #tpu.memory_space<vmem>>, vector<1x32xf32>
    %10 = vector.broadcast %9 : vector<1x32xf32> to vector<2x32xf32>
    %11 = arith.addf %8, %10 : vector<2x32xf32>
    %cst_10 = arith.constant 0.000000e+00 : f32
    %12 = vector.broadcast %cst_10 : f32 to vector<2x32xf32>
    %13 = arith.maximumf %11, %12 : vector<2x32xf32>
    %14 = arith.truncf %13 : vector<2x32xf32> to vector<2x32xbf16>
    %c0_11 = arith.constant 0 : index
    %c0_12 = arith.constant 0 : index
    %15 = vector.load %arg6[%c0_11, %c0_12] : memref<32x32xbf16, #tpu.memory_space<vmem>>, vector<32x32xbf16>
    %cst_13 = arith.constant dense<0.000000e+00> : vector<2x32xf32>
    %16 = tpu.matmul %14, %15, %cst_13 {dimension_numbers = #tpu.dot_dimension_numbers<[1], [0], [0], [1], [0, 0, 1, 1], [], []>} : vector<2x32xbf16>, vector<32x32xbf16>, vector<2x32xf32> -> vector<2x32xf32>
    %c0_14 = arith.constant 0 : index
    %c0_15 = arith.constant 0 : index
    %17 = vector.load %arg7[%c0_14, %c0_15] : memref<1x32xf32, #tpu.memory_space<vmem>>, vector<1x32xf32>
    %18 = vector.broadcast %17 : vector<1x32xf32> to vector<2x32xf32>
    %19 = arith.addf %16, %18 : vector<2x32xf32>
    %cst_16 = arith.constant 0.000000e+00 : f32
    %20 = vector.broadcast %cst_16 : f32 to vector<2x32xf32>
    %21 = arith.maximumf %19, %20 : vector<2x32xf32>
    %22 = arith.truncf %21 : vector<2x32xf32> to vector<2x32xbf16>
    %c0_17 = arith.constant 0 : index
    %c0_18 = arith.constant 0 : index
    %23 = vector.load %arg8[%c0_17, %c0_18] : memref<32x4xbf16, #tpu.memory_space<vmem>>, vector<32x4xbf16>
    %cst_19 = arith.constant dense<0.000000e+00> : vector<2x4xf32>
    %24 = tpu.matmul %22, %23, %cst_19 {dimension_numbers = #tpu.dot_dimension_numbers<[1], [0], [0], [1], [0, 0, 1, 1], [], []>} : vector<2x32xbf16>, vector<32x4xbf16>, vector<2x4xf32> -> vector<2x4xf32>
    %c0_20 = arith.constant 0 : index
    %c0_21 = arith.constant 0 : index
    %25 = vector.load %arg9[%c0_20, %c0_21] : memref<1x4xf32, #tpu.memory_space<vmem>>, vector<1x4xf32>
    %26 = vector.broadcast %25 : vector<1x4xf32> to vector<2x4xf32>
    %27 = arith.addf %24, %26 : vector<2x4xf32>
    %28 = math.tanh %27 : vector<2x4xf32>
    %c0_22 = arith.constant 0 : index
    %c0_23 = arith.constant 0 : index
    %29 = vector.load %arg10[%c0_22, %c0_23] : memref<2x4xf32, #tpu.memory_space<vmem>>, vector<2x4xf32>
    tpu.vector_store %arg10[%c0_22, %c0_23], %28 {strides = array<i32>} : memref<2x4xf32, #tpu.memory_space<vmem>>, vector<2x4xf32>,
    return
  }
  func.func @transform_0(%arg0: i32) -> (i32, i32) {
    %c0_i32 = arith.constant 0 : i32
    %c0_i32_0 = arith.constant 0 : i32
    return %arg0, %c0_i32 : i32, i32
  }
  func.func @transform_1(%arg0: i32) -> (i32, i32) {
    %c0_i32 = arith.constant 0 : i32
    %c0_i32_0 = arith.constant 0 : i32
    return %arg0, %c0_i32 : i32, i32
  }
  func.func @transform_2(%arg0: i32) -> (i32, i32) {
    %c0_i32 = arith.constant 0 : i32
    %c0_i32_0 = arith.constant 0 : i32
    %c0_i32_1 = arith.constant 0 : i32
    return %c0_i32, %c0_i32_0 : i32, i32
  }
  func.func @transform_3(%arg0: i32) -> (i32, i32) {
    %c0_i32 = arith.constant 0 : i32
    %c0_i32_0 = arith.constant 0 : i32
    %c0_i32_1 = arith.constant 0 : i32
    return %c0_i32, %c0_i32_0 : i32, i32
  }
  func.func @transform_4(%arg0: i32) -> (i32, i32) {
    %c0_i32 = arith.constant 0 : i32
    %c0_i32_0 = arith.constant 0 : i32
    %c0_i32_1 = arith.constant 0 : i32
    return %c0_i32, %c0_i32_0 : i32, i32
  }
  func.func @transform_5(%arg0: i32) -> (i32, i32) {
    %c0_i32 = arith.constant 0 : i32
    %c0_i32_0 = arith.constant 0 : i32
    %c0_i32_1 = arith.constant 0 : i32
    return %c0_i32, %c0_i32_0 : i32, i32
  }
  func.func @transform_6(%arg0: i32) -> (i32, i32) {
    %c0_i32 = arith.constant 0 : i32
    %c0_i32_0 = arith.constant 0 : i32
    %c0_i32_1 = arith.constant 0 : i32
    return %c0_i32, %c0_i32_0 : i32, i32
  }
  func.func @transform_7(%arg0: i32) -> (i32, i32) {
    %c0_i32 = arith.constant 0 : i32
    %c0_i32_0 = arith.constant 0 : i32
    %c0_i32_1 = arith.constant 0 : i32
    return %c0_i32, %c0_i32_0 : i32, i32
  }
  func.func @transform_8(%arg0: i32) -> (i32, i32) {
    %c0_i32 = arith.constant 0 : i32
    %c0_i32_0 = arith.constant 0 : i32
    %c0_i32_1 = arith.constant 0 : i32
    return %c0_i32, %c0_i32_0 : i32, i32
  }
  func.func @transform_9(%arg0: i32) -> (i32, i32) {
    %c0_i32 = arith.constant 0 : i32
    %c0_i32_0 = arith.constant 0 : i32
    return %arg0, %c0_i32 : i32, i32
  }
}

</mosaic_0001>

<llo_original>
// kernel: tpu_custom_call.1
$region0: #{tpu_custom_call.1}
  #allocation0 [shape = 'u32[]', space=smem, size = 0x4, offset = 0x4, fixed_abs, tag = 'smem constant byte address 0x4 - core index']
  #allocation1 [shape = 'u32[144,128]{1,0:T(1,128)}', space=vmem, size = 0x12000, scoped, tag = 'internal scratch']
  %s0 = inlined_call_operand.vmem [shape: f32[2,1024], index: 0, kind: input, shape index: {}]
  %s1 = inlined_call_operand.vmem [shape: f32[2,8], index: 1, kind: input, shape index: {}]
  %s2 = inlined_call_operand.vmem [shape: bf16[1024,32], index: 2, kind: input, shape index: {}]
  %s3 = inlined_call_operand.vmem [shape: bf16[8,32], index: 3, kind: input, shape index: {}]
  %s4 = inlined_call_operand.vmem [shape: f32[1,32], index: 4, kind: input, shape index: {}]
  %s5 = inlined_call_operand.vmem [shape: bf16[32,32], index: 5, kind: input, shape index: {}]
  %s6 = inlined_call_operand.vmem [shape: f32[1,32], index: 6, kind: input, shape index: {}]
  %s7 = inlined_call_operand.vmem [shape: bf16[32,4], index: 7, kind: input, shape index: {}]
  %s8 = inlined_call_operand.vmem [shape: f32[1,4], index: 8, kind: input, shape index: {}]
  %s9 = inlined_call_operand.hbm [shape: f32[2,4], index: 9, kind: output, shape index: {}]
  %s10 = sld [smem:[#allocation0]]
  $region46: #{tpu_custom_call.1} parent=0
    _
  %s12 = ssub.s32 1, %s10
  %s13 = scalar_select 0, %s12, %s10
  $region1: #{tpu_custom_call.1} parent=0
    #allocation2 [shape = 'u8[1024]{0}', space=vmem, size = 0x400, scoped, tag = 'output window, operand 0, single buffered']
    #allocation3 [shape = 's32[1]{0}', space=sflag, size = 0x4, scoped, tag = 'scoped memory for tpu_custom_call.1']
    %14 = vsyncpa [#allocation3], 0
    // Predicated region
    $region2: #{tpu_custom_call.1} parent=1 // pred_check
      _
    $region3: #{tpu_custom_call.1} parent=1 // pred_check_branch
      %16 = sbr.rel (0) target = $region5
    $region4: #{tpu_custom_call.1} parent=1 // pred_region
      _
    $region5: #{tpu_custom_call.1} parent=1 // pred_fallthru
      _
    // Predicated region
    $region6: #{tpu_custom_call.1} parent=1 // pred_check
      _
    $region7: #{tpu_custom_call.1} parent=1 // pred_check_branch
      %18 = sbr.rel (0) target = $region9
    $region8: #{tpu_custom_call.1} parent=1 // pred_region
      _
    $region9: #{tpu_custom_call.1} parent=1 // pred_fallthru
      _
    // Predicated region
    $region10: #{tpu_custom_call.1} parent=1 // pred_check
      _
    $region11: #{tpu_custom_call.1} parent=1 // pred_check_branch
      %20 = sbr.rel (0) target = $region13
    $region12: #{tpu_custom_call.1} parent=1 // pred_region
      _
    $region13: #{tpu_custom_call.1} parent=1 // pred_fallthru
      _
    // Predicated region
    $region14: #{tpu_custom_call.1} parent=1 // pred_check
      _
    $region15: #{tpu_custom_call.1} parent=1 // pred_check_branch
      %22 = sbr.rel (0) target = $region17
    $region16: #{tpu_custom_call.1} parent=1 // pred_region
      _
    $region17: #{tpu_custom_call.1} parent=1 // pred_fallthru
      _
    // Predicated region
    $region18: #{tpu_custom_call.1} parent=1 // pred_check
      _
    $region19: #{tpu_custom_call.1} parent=1 // pred_check_branch
      %24 = sbr.rel (0) target = $region21
    $region20: #{tpu_custom_call.1} parent=1 // pred_region
      _
    $region21: #{tpu_custom_call.1} parent=1 // pred_fallthru
      _
    // Predicated region
    $region22: #{tpu_custom_call.1} parent=1 // pred_check
      _
    $region23: #{tpu_custom_call.1} parent=1 // pred_check_branch
      %26 = sbr.rel (0) target = $region25
    $region24: #{tpu_custom_call.1} parent=1 // pred_region
      _
    $region25: #{tpu_custom_call.1} parent=1 // pred_fallthru
      _
    // Predicated region
    $region26: #{tpu_custom_call.1} parent=1 // pred_check
      _
    $region27: #{tpu_custom_call.1} parent=1 // pred_check_branch
      %28 = sbr.rel (0) target = $region29
    $region28: #{tpu_custom_call.1} parent=1 // pred_region
      _
    $region29: #{tpu_custom_call.1} parent=1 // pred_fallthru
      _
    // Predicated region
    $region30: #{tpu_custom_call.1} parent=1 // pred_check
      _
    $region31: #{tpu_custom_call.1} parent=1 // pred_check_branch
      %30 = sbr.rel (0) target = $region33
    $region32: #{tpu_custom_call.1} parent=1 // pred_region
      _
    $region33: #{tpu_custom_call.1} parent=1 // pred_fallthru
      _
    // Predicated region
    $region34: #{tpu_custom_call.1} parent=1 // pred_check
      _
    $region35: #{tpu_custom_call.1} parent=1 // pred_check_branch
      %32 = sbr.rel (0) target = $region37
    $region36: #{tpu_custom_call.1} parent=1 // pred_region
      _
    $region37: #{tpu_custom_call.1} parent=1 // pred_fallthru
      _
    %v34 = vld [vmem:[%s0] sm:$0xff]
    %v35 = vld [vmem:[%s0 + $0x8] sm:$0xff]
    %v38 = vcombine.high %v34, %v34
    %v40 = vunpack.c.l.s4 1983009808
    %v41 = vunpack.c.0.s8 %v40
    %v42 = vlaneseq
    %v43 = vshrl.u32 %v42, 7
    %v44 = vsub.s32 %v41, %v43
    %v45 = vrot.slane %v34, %v44
    %v47 = vunpack.c.l.s4 1983009808
    %v48 = vunpack.c.0.s8 %v47
    %v49 = vlaneseq
    %v50 = vshrl.u32 %v49, 7
    %v51 = vsub.s32 %v48, %v50
    %v52 = vrot.slane %v38, %v51
    %v53 = vcombine.high %v45, %v45
    %v54 = vcombine.high %v52, %v52
    %v55 = vcombine.high %v35, %v35
    %v57 = vunpack.c.l.s4 1983009808
    %v58 = vunpack.c.0.s8 %v57
    %v59 = vlaneseq
    %v60 = vshrl.u32 %v59, 7
    %v61 = vsub.s32 %v58, %v60
    %v62 = vrot.slane %v35, %v61
    %v64 = vunpack.c.l.s4 1983009808
    %v65 = vunpack.c.0.s8 %v64
    %v66 = vlaneseq
    %v67 = vshrl.u32 %v66, 7
    %v68 = vsub.s32 %v65, %v67
    %v69 = vrot.slane %v55, %v68
    %v70 = vcombine.high %v62, %v62
    %v71 = vcombine.high %v69, %v69
    %v80 = vpack.c.bf16 %v45, %v45
    %v81 = vpack.c.bf16 %v53, %v53
    %v82 = vpack.c.bf16 %v52, %v52
    %v83 = vpack.c.bf16 %v54, %v54
    %v84 = vpack.c.bf16 %v62, %v62
    %v85 = vpack.c.bf16 %v70, %v70
    %v86 = vpack.c.bf16 %v69, %v69
    %v87 = vpack.c.bf16 %v71, %v71
    %v88 = vld [vmem:[%s1] sm:$0x3]
    %v89 = vpack.c.bf16 %v88, %v88
    %v90 = vld [vmem:[%s2] sm:$0xf]
    %v91 = vld [vmem:[%s2 + $0x4] sm:$0xf]
    %v92 = vld [vmem:[%s2 + $0x8] sm:$0xf]
    %v93 = vld [vmem:[%s2 + $0xc] sm:$0xf]
    %v94 = vld [vmem:[%s2 + $0x10] sm:$0xf]
    %v95 = vld [vmem:[%s2 + $0x14] sm:$0xf]
    %v96 = vld [vmem:[%s2 + $0x18] sm:$0xf]
    %v97 = vld [vmem:[%s2 + $0x1c] sm:$0xf]
    %v98 = vld [vmem:[%s2 + $0x20] sm:$0xf]
    %v99 = vld [vmem:[%s2 + $0x24] sm:$0xf]
    %v100 = vld [vmem:[%s2 + $0x28] sm:$0xf]
    %v101 = vld [vmem:[%s2 + $0x2c] sm:$0xf]
    %v102 = vld [vmem:[%s2 + $0x30] sm:$0xf]
    %v103 = vld [vmem:[%s2 + $0x34] sm:$0xf]
    %v104 = vld [vmem:[%s2 + $0x38] sm:$0xf]
    %v105 = vld [vmem:[%s2 + $0x3c] sm:$0xf]
    %v106 = vld [vmem:[%s2 + $0x40] sm:$0xf]
    %v107 = vld [vmem:[%s2 + $0x44] sm:$0xf]
    %v108 = vld [vmem:[%s2 + $0x48] sm:$0xf]
    %v109 = vld [vmem:[%s2 + $0x4c] sm:$0xf]
    %v110 = vld [vmem:[%s2 + $0x50] sm:$0xf]
    %v111 = vld [vmem:[%s2 + $0x54] sm:$0xf]
    %v112 = vld [vmem:[%s2 + $0x58] sm:$0xf]
    %v113 = vld [vmem:[%s2 + $0x5c] sm:$0xf]
    %v114 = vld [vmem:[%s2 + $0x60] sm:$0xf]
    %v115 = vld [vmem:[%s2 + $0x64] sm:$0xf]
    %v116 = vld [vmem:[%s2 + $0x68] sm:$0xf]
    %v117 = vld [vmem:[%s2 + $0x6c] sm:$0xf]
    %v118 = vld [vmem:[%s2 + $0x70] sm:$0xf]
    %v119 = vld [vmem:[%s2 + $0x74] sm:$0xf]
    %v120 = vld [vmem:[%s2 + $0x78] sm:$0xf]
    %v121 = vld [vmem:[%s2 + $0x7c] sm:$0xf]
    %v122 = vld [vmem:[%s2 + $0x80] sm:$0xf]
    %v123 = vld [vmem:[%s2 + $0x84] sm:$0xf]
    %v124 = vld [vmem:[%s2 + $0x88] sm:$0xf]
    %v125 = vld [vmem:[%s2 + $0x8c] sm:$0xf]
    %v126 = vld [vmem:[%s2 + $0x90] sm:$0xf]
    %v127 = vld [vmem:[%s2 + $0x94] sm:$0xf]
    %v128 = vld [vmem:[%s2 + $0x98] sm:$0xf]
    %v129 = vld [vmem:[%s2 + $0x9c] sm:$0xf]
    %v130 = vld [vmem:[%s2 + $0xa0] sm:$0xf]
    %v131 = vld [vmem:[%s2 + $0xa4] sm:$0xf]
    %v132 = vld [vmem:[%s2 + $0xa8] sm:$0xf]
    %v133 = vld [vmem:[%s2 + $0xac] sm:$0xf]
    %v134 = vld [vmem:[%s2 + $0xb0] sm:$0xf]
    %v135 = vld [vmem:[%s2 + $0xb4] sm:$0xf]
    %v136 = vld [vmem:[%s2 + $0xb8] sm:$0xf]
    %v137 = vld [vmem:[%s2 + $0xbc] sm:$0xf]
    %v138 = vld [vmem:[%s2 + $0xc0] sm:$0xf]
    %v139 = vld [vmem:[%s2 + $0xc4] sm:$0xf]
    %v140 = vld [vmem:[%s2 + $0xc8] sm:$0xf]
    %v141 = vld [vmem:[%s2 + $0xcc] sm:$0xf]
    %v142 = vld [vmem:[%s2 + $0xd0] sm:$0xf]
    %v143 = vld [vmem:[%s2 + $0xd4] sm:$0xf]
    %v144 = vld [vmem:[%s2 + $0xd8] sm:$0xf]
    %v145 = vld [vmem:[%s2 + $0xdc] sm:$0xf]
    %v146 = vld [vmem:[%s2 + $0xe0] sm:$0xf]
    %v147 = vld [vmem:[%s2 + $0xe4] sm:$0xf]
    %v148 = vld [vmem:[%s2 + $0xe8] sm:$0xf]
    %v149 = vld [vmem:[%s2 + $0xec] sm:$0xf]
    %v150 = vld [vmem:[%s2 + $0xf0] sm:$0xf]
    %v151 = vld [vmem:[%s2 + $0xf4] sm:$0xf]
    %v152 = vld [vmem:[%s2 + $0xf8] sm:$0xf]
    %v153 = vld [vmem:[%s2 + $0xfc] sm:$0xf]
    %v154 = vld [vmem:[%s2 + $0x100] sm:$0xf]
    %v155 = vld [vmem:[%s2 + $0x104] sm:$0xf]
    %v156 = vld [vmem:[%s2 + $0x108] sm:$0xf]
    %v157 = vld [vmem:[%s2 + $0x10c] sm:$0xf]
    %v158 = vld [vmem:[%s2 + $0x110] sm:$0xf]
    %v159 = vld [vmem:[%s2 + $0x114] sm:$0xf]
    %v160 = vld [vmem:[%s2 + $0x118] sm:$0xf]
    %v161 = vld [vmem:[%s2 + $0x11c] sm:$0xf]
    %v162 = vld [vmem:[%s2 + $0x120] sm:$0xf]
    %v163 = vld [vmem:[%s2 + $0x124] sm:$0xf]
    %v164 = vld [vmem:[%s2 + $0x128] sm:$0xf]
    %v165 = vld [vmem:[%s2 + $0x12c] sm:$0xf]
    %v166 = vld [vmem:[%s2 + $0x130] sm:$0xf]
    %v167 = vld [vmem:[%s2 + $0x134] sm:$0xf]
    %v168 = vld [vmem:[%s2 + $0x138] sm:$0xf]
    %v169 = vld [vmem:[%s2 + $0x13c] sm:$0xf]
    %v170 = vld [vmem:[%s2 + $0x140] sm:$0xf]
    %v171 = vld [vmem:[%s2 + $0x144] sm:$0xf]
    %v172 = vld [vmem:[%s2 + $0x148] sm:$0xf]
    %v173 = vld [vmem:[%s2 + $0x14c] sm:$0xf]
    %v174 = vld [vmem:[%s2 + $0x150] sm:$0xf]
    %v175 = vld [vmem:[%s2 + $0x154] sm:$0xf]
    %v176 = vld [vmem:[%s2 + $0x158] sm:$0xf]
    %v177 = vld [vmem:[%s2 + $0x15c] sm:$0xf]
    %v178 = vld [vmem:[%s2 + $0x160] sm:$0xf]
    %v179 = vld [vmem:[%s2 + $0x164] sm:$0xf]
    %v180 = vld [vmem:[%s2 + $0x168] sm:$0xf]
    %v181 = vld [vmem:[%s2 + $0x16c] sm:$0xf]
    %v182 = vld [vmem:[%s2 + $0x170] sm:$0xf]
    %v183 = vld [vmem:[%s2 + $0x174] sm:$0xf]
    %v184 = vld [vmem:[%s2 + $0x178] sm:$0xf]
    %v185 = vld [vmem:[%s2 + $0x17c] sm:$0xf]
    %v186 = vld [vmem:[%s2 + $0x180] sm:$0xf]
    %v187 = vld [vmem:[%s2 + $0x184] sm:$0xf]
    %v188 = vld [vmem:[%s2 + $0x188] sm:$0xf]
    %v189 = vld [vmem:[%s2 + $0x18c] sm:$0xf]
    %v190 = vld [vmem:[%s2 + $0x190] sm:$0xf]
    %v191 = vld [vmem:[%s2 + $0x194] sm:$0xf]
    %v192 = vld [vmem:[%s2 + $0x198] sm:$0xf]
    %v193 = vld [vmem:[%s2 + $0x19c] sm:$0xf]
    %v194 = vld [vmem:[%s2 + $0x1a0] sm:$0xf]
    %v195 = vld [vmem:[%s2 + $0x1a4] sm:$0xf]
    %v196 = vld [vmem:[%s2 + $0x1a8] sm:$0xf]
    %v197 = vld [vmem:[%s2 + $0x1ac] sm:$0xf]
    %v198 = vld [vmem:[%s2 + $0x1b0] sm:$0xf]
    %v199 = vld [vmem:[%s2 + $0x1b4] sm:$0xf]
    %v200 = vld [vmem:[%s2 + $0x1b8] sm:$0xf]
    %v201 = vld [vmem:[%s2 + $0x1bc] sm:$0xf]
    %v202 = vld [vmem:[%s2 + $0x1c0] sm:$0xf]
    %v203 = vld [vmem:[%s2 + $0x1c4] sm:$0xf]
    %v204 = vld [vmem:[%s2 + $0x1c8] sm:$0xf]
    %v205 = vld [vmem:[%s2 + $0x1cc] sm:$0xf]
    %v206 = vld [vmem:[%s2 + $0x1d0] sm:$0xf]
    %v207 = vld [vmem:[%s2 + $0x1d4] sm:$0xf]
    %v208 = vld [vmem:[%s2 + $0x1d8] sm:$0xf]
    %v209 = vld [vmem:[%s2 + $0x1dc] sm:$0xf]
    %v210 = vld [vmem:[%s2 + $0x1e0] sm:$0xf]
    %v211 = vld [vmem:[%s2 + $0x1e4] sm:$0xf]
    %v212 = vld [vmem:[%s2 + $0x1e8] sm:$0xf]
    %v213 = vld [vmem:[%s2 + $0x1ec] sm:$0xf]
    %v214 = vld [vmem:[%s2 + $0x1f0] sm:$0xf]
    %v215 = vld [vmem:[%s2 + $0x1f4] sm:$0xf]
    %v216 = vld [vmem:[%s2 + $0x1f8] sm:$0xf]
    %v217 = vld [vmem:[%s2 + $0x1fc] sm:$0xf]
    %v218 = vld [vmem:[%s3] sm:$0xf]
    %vm219 = vcmask 64512
    %v221 = vsel %vm219, %v89, 0
    %vm223 = vcmask 1043456
    %v225 = vsel %vm223, %v218, 0
    %227 = vmatprep.subr.bf16.mxu0 0
    %228 = vmatpush1.bf16.msra.mxu0 %v225
    %229 = vmatprep.subr.bf16.mxu0 0
    %230 = vmatpush1.bf16.msra.mxu0 0
    %231 = vmatprep.subr.bf16.mxu0 0
    %232 = vmatpush1.bf16.msra.mxu0 0
    %233 = vmatprep.subr.bf16.mxu0 0
    %234 = vmatpush1.bf16.msra.mxu0 0
    %235 = vmatprep.subr.bf16.mxu0 0
    %236 = vmatpush1.bf16.msra.mxu0 0
    %237 = vmatprep.subr.bf16.mxu0 0
    %238 = vmatpush1.bf16.msra.mxu0 0
    %239 = vmatprep.subr.bf16.mxu0 0
    %240 = vmatpush1.bf16.msra.mxu0 0
    %241 = vmatprep.subr.bf16.mxu0 0
    %242 = vmatpush1.bf16.msra.mxu0 0
    %243 = vmatprep.subr.bf16.mxu0 0
    %244 = vmatpush1.bf16.msra.mxu0 0
    %245 = vmatprep.subr.bf16.mxu0 0
    %246 = vmatpush1.bf16.msra.mxu0 0
    %247 = vmatprep.subr.bf16.mxu0 0
    %248 = vmatpush1.bf16.msra.mxu0 0
    %249 = vmatprep.subr.bf16.mxu0 0
    %250 = vmatpush1.bf16.msra.mxu0 0
    %251 = vmatprep.subr.bf16.mxu0 0
    %252 = vmatpush1.bf16.msra.mxu0 0
    %253 = vmatprep.subr.bf16.mxu0 0
    %254 = vmatpush1.bf16.msra.mxu0 0
    %255 = vmatprep.subr.bf16.mxu0 0
    %256 = vmatpush1.bf16.msra.mxu0 0
    %257 = vmatprep.subr.bf16.mxu0 0
    %258 = vmatpush1.bf16.msra.mxu0 0
    %259 = vmatprep.mubr.bf16.mxu0 0
    %260 = vmatmul.mubr.bf16.gmra.mrb[0].mxu0 %v221
    %v261 = vpop.f32.mrb[0].mxu0
    %v262 = vadd.f32 0.0, %v261
    %v263 = vpop.f32.mrb[0].mxu0
    %v264 = vpop.f32.mrb[0].mxu0
    %v265 = vpop.f32.mrb[0].mxu0
    %266 = vdwg.mxu0
    %v395 = vunpack.c.l.b16 %v90
    %v396 = vunpack.c.l.b16 %v91
    %v397 = vunpack.c.l.b16 %v92
    %v398 = vunpack.c.l.b16 %v93
    %v399 = vunpack.c.l.b16 %v94
    %v400 = vunpack.c.l.b16 %v95
    %v401 = vunpack.c.l.b16 %v96
    %v402 = vunpack.c.l.b16 %v97
    %v403 = vunpack.c.l.b16 %v98
    %v404 = vunpack.c.l.b16 %v99
    %v405 = vunpack.c.l.b16 %v100
    %v406 = vunpack.c.l.b16 %v101
    %v407 = vunpack.c.l.b16 %v102
    %v408 = vunpack.c.l.b16 %v103
    %v409 = vunpack.c.l.b16 %v104
    %v410 = vunpack.c.l.b16 %v105
    %v411 = vunpack.c.l.b16 %v106
    %v412 = vunpack.c.l.b16 %v107
    %v413 = vunpack.c.l.b16 %v108
    %v414 = vunpack.c.l.b16 %v109
    %v415 = vunpack.c.l.b16 %v110
    %v416 = vunpack.c.l.b16 %v111
    %v417 = vunpack.c.l.b16 %v112
    %v418 = vunpack.c.l.b16 %v113
    %v419 = vunpack.c.l.b16 %v114
    %v420 = vunpack.c.l.b16 %v115
    %v421 = vunpack.c.l.b16 %v116
    %v422 = vunpack.c.l.b16 %v117
    %v423 = vunpack.c.l.b16 %v118
    %v424 = vunpack.c.l.b16 %v119
    %v425 = vunpack.c.l.b16 %v120
    %v426 = vunpack.c.l.b16 %v121
    %v427 = vunpack.c.l.b16 %v122
    %v428 = vunpack.c.l.b16 %v123
    %v429 = vunpack.c.l.b16 %v124
    %v430 = vunpack.c.l.b16 %v125
    %v431 = vunpack.c.l.b16 %v126
    %v432 = vunpack.c.l.b16 %v127
    %v433 = vunpack.c.l.b16 %v128
    %v434 = vunpack.c.l.b16 %v129
    %v435 = vunpack.c.l.b16 %v130
    %v436 = vunpack.c.l.b16 %v131
    %v437 = vunpack.c.l.b16 %v132
    %v438 = vunpack.c.l.b16 %v133
    %v439 = vunpack.c.l.b16 %v134
    %v440 = vunpack.c.l.b16 %v135
    %v441 = vunpack.c.l.b16 %v136
    %v442 = vunpack.c.l.b16 %v137
    %v443 = vunpack.c.l.b16 %v138
    %v444 = vunpack.c.l.b16 %v139
    %v445 = vunpack.c.l.b16 %v140
    %v446 = vunpack.c.l.b16 %v141
    %v447 = vunpack.c.l.b16 %v142
    %v448 = vunpack.c.l.b16 %v143
    %v449 = vunpack.c.l.b16 %v144
    %v450 = vunpack.c.l.b16 %v145
    %v451 = vunpack.c.l.b16 %v146
    %v452 = vunpack.c.l.b16 %v147
    %v453 = vunpack.c.l.b16 %v148
    %v454 = vunpack.c.l.b16 %v149
    %v455 = vunpack.c.l.b16 %v150
    %v456 = vunpack.c.l.b16 %v151
    %v457 = vunpack.c.l.b16 %v152
    %v458 = vunpack.c.l.b16 %v153
    %v459 = vunpack.c.l.b16 %v154
    %v460 = vunpack.c.l.b16 %v155
    %v461 = vunpack.c.l.b16 %v156
    %v462 = vunpack.c.l.b16 %v157
    %v463 = vunpack.c.l.b16 %v158
    %v464 = vunpack.c.l.b16 %v159
    %v465 = vunpack.c.l.b16 %v160
    %v466 = vunpack.c.l.b16 %v161
    %v467 = vunpack.c.l.b16 %v162
    %v468 = vunpack.c.l.b16 %v163
    %v469 = vunpack.c.l.b16 %v164
    %v470 = vunpack.c.l.b16 %v165
    %v471 = vunpack.c.l.b16 %v166
    %v472 = vunpack.c.l.b16 %v167
    %v473 = vunpack.c.l.b16 %v168
    %v474 = vunpack.c.l.b16 %v169
    %v475 = vunpack.c.l.b16 %v170
    %v476 = vunpack.c.l.b16 %v171
    %v477 = vunpack.c.l.b16 %v172
    %v478 = vunpack.c.l.b16 %v173
    %v479 = vunpack.c.l.b16 %v174
    %v480 = vunpack.c.l.b16 %v175
    %v481 = vunpack.c.l.b16 %v176
    %v482 = vunpack.c.l.b16 %v177
    %v483 = vunpack.c.l.b16 %v178
    %v484 = vunpack.c.l.b16 %v179
    %v485 = vunpack.c.l.b16 %v180
    %v486 = vunpack.c.l.b16 %v181
    %v487 = vunpack.c.l.b16 %v182
    %v488 = vunpack.c.l.b16 %v183
    %v489 = vunpack.c.l.b16 %v184
    %v490 = vunpack.c.l.b16 %v185
    %v491 = vunpack.c.l.b16 %v186
    %v492 = vunpack.c.l.b16 %v187
    %v493 = vunpack.c.l.b16 %v188
    %v494 = vunpack.c.l.b16 %v189
    %v495 = vunpack.c.l.b16 %v190
    %v496 = vunpack.c.l.b16 %v191
    %v497 = vunpack.c.l.b16 %v192
    %v498 = vunpack.c.l.b16 %v193
    %v499 = vunpack.c.l.b16 %v194
    %v500 = vunpack.c.l.b16 %v195
    %v501 = vunpack.c.l.b16 %v196
    %v502 = vunpack.c.l.b16 %v197
    %v503 = vunpack.c.l.b16 %v198
    %v504 = vunpack.c.l.b16 %v199
    %v505 = vunpack.c.l.b16 %v200
    %v506 = vunpack.c.l.b16 %v201
    %v507 = vunpack.c.l.b16 %v202
    %v508 = vunpack.c.l.b16 %v203
    %v509 = vunpack.c.l.b16 %v204
    %v510 = vunpack.c.l.b16 %v205
    %v511 = vunpack.c.l.b16 %v206
    %v512 = vunpack.c.l.b16 %v207
    %v513 = vunpack.c.l.b16 %v208
    %v514 = vunpack.c.l.b16 %v209
    %v515 = vunpack.c.l.b16 %v210
    %v516 = vunpack.c.l.b16 %v211
    %v517 = vunpack.c.l.b16 %v212
    %v518 = vunpack.c.l.b16 %v213
    %v519 = vunpack.c.l.b16 %v214
    %v520 = vunpack.c.l.b16 %v215
    %v521 = vunpack.c.l.b16 %v216
    %v522 = vunpack.c.l.b16 %v217
    %v523 = vpack.c.b16 %v396, %v395
    %v524 = vpack.c.b16 %v398, %v397
    %v525 = vpack.c.b16 %v400, %v399
    %v526 = vpack.c.b16 %v402, %v401
    %v527 = vpack.c.b16 %v404, %v403
    %v528 = vpack.c.b16 %v406, %v405
    %v529 = vpack.c.b16 %v408, %v407
    %v530 = vpack.c.b16 %v410, %v409
    %v531 = vpack.c.b16 %v412, %v411
    %v532 = vpack.c.b16 %v414, %v413
    %v533 = vpack.c.b16 %v416, %v415
    %v534 = vpack.c.b16 %v418, %v417
    %v535 = vpack.c.b16 %v420, %v419
    %v536 = vpack.c.b16 %v422, %v421
    %v537 = vpack.c.b16 %v424, %v423
    %v538 = vpack.c.b16 %v426, %v425
    %v539 = vpack.c.b16 %v428, %v427
    %v540 = vpack.c.b16 %v430, %v429
    %v541 = vpack.c.b16 %v432, %v431
    %v542 = vpack.c.b16 %v434, %v433
    %v543 = vpack.c.b16 %v436, %v435
    %v544 = vpack.c.b16 %v438, %v437
    %v545 = vpack.c.b16 %v440, %v439
    %v546 = vpack.c.b16 %v442, %v441
    %v547 = vpack.c.b16 %v444, %v443
    %v548 = vpack.c.b16 %v446, %v445
    %v549 = vpack.c.b16 %v448, %v447
    %v550 = vpack.c.b16 %v450, %v449
    %v551 = vpack.c.b16 %v452, %v451
    %v552 = vpack.c.b16 %v454, %v453
    %v553 = vpack.c.b16 %v456, %v455
    %v554 = vpack.c.b16 %v458, %v457
    %v555 = vpack.c.b16 %v460, %v459
    %v556 = vpack.c.b16 %v462, %v461
    %v557 = vpack.c.b16 %v464, %v463
    %v558 = vpack.c.b16 %v466, %v465
    %v559 = vpack.c.b16 %v468, %v467
    %v560 = vpack.c.b16 %v470, %v469
    %v561 = vpack.c.b16 %v472, %v471
    %v562 = vpack.c.b16 %v474, %v473
    %v563 = vpack.c.b16 %v476, %v475
    %v564 = vpack.c.b16 %v478, %v477
    %v565 = vpack.c.b16 %v480, %v479
    %v566 = vpack.c.b16 %v482, %v481
    %v567 = vpack.c.b16 %v484, %v483
    %v568 = vpack.c.b16 %v486, %v485
    %v569 = vpack.c.b16 %v488, %v487
    %v570 = vpack.c.b16 %v490, %v489
    %v571 = vpack.c.b16 %v492, %v491
    %v572 = vpack.c.b16 %v494, %v493
    %v573 = vpack.c.b16 %v496, %v495
    %v574 = vpack.c.b16 %v498, %v497
    %v575 = vpack.c.b16 %v500, %v499
    %v576 = vpack.c.b16 %v502, %v501
    %v577 = vpack.c.b16 %v504, %v503
    %v578 = vpack.c.b16 %v506, %v505
    %v579 = vpack.c.b16 %v508, %v507
    %v580 = vpack.c.b16 %v510, %v509
    %v581 = vpack.c.b16 %v512, %v511
    %v582 = vpack.c.b16 %v514, %v513
    %v583 = vpack.c.b16 %v516, %v515
    %v584 = vpack.c.b16 %v518, %v517
    %v585 = vpack.c.b16 %v520, %v519
    %v586 = vpack.c.b16 %v522, %v521
    %651 = vmatprep.subr.bf16.mxu0 0
    %652 = vmatpush1.bf16.msra.mxu0 %v523
    %653 = vmatprep.subr.bf16.mxu0 0
    %654 = vmatpush1.bf16.msra.mxu0 %v524
    %655 = vmatprep.subr.bf16.mxu0 0
    %656 = vmatpush1.bf16.msra.mxu0 %v525
    %657 = vmatprep.subr.bf16.mxu0 0
    %658 = vmatpush1.bf16.msra.mxu0 %v526
    %659 = vmatprep.subr.bf16.mxu0 0
    %660 = vmatpush1.bf16.msra.mxu0 %v527
    %661 = vmatprep.subr.bf16.mxu0 0
    %662 = vmatpush1.bf16.msra.mxu0 %v528
    %663 = vmatprep.subr.bf16.mxu0 0
    %664 = vmatpush1.bf16.msra.mxu0 %v529
    %665 = vmatprep.subr.bf16.mxu0 0
    %666 = vmatpush1.bf16.msra.mxu0 %v530
    %667 = vmatprep.subr.bf16.mxu0 0
    %668 = vmatpush1.bf16.msra.mxu0 %v531
    %669 = vmatprep.subr.bf16.mxu0 0
    %670 = vmatpush1.bf16.msra.mxu0 %v532
    %671 = vmatprep.subr.bf16.mxu0 0
    %672 = vmatpush1.bf16.msra.mxu0 %v533
    %673 = vmatprep.subr.bf16.mxu0 0
    %674 = vmatpush1.bf16.msra.mxu0 %v534
    %675 = vmatprep.subr.bf16.mxu0 0
    %676 = vmatpush1.bf16.msra.mxu0 %v535
    %677 = vmatprep.subr.bf16.mxu0 0
    %678 = vmatpush1.bf16.msra.mxu0 %v536
    %679 = vmatprep.subr.bf16.mxu0 0
    %680 = vmatpush1.bf16.msra.mxu0 %v537
    %681 = vmatprep.subr.bf16.mxu0 0
    %682 = vmatpush1.bf16.msra.mxu0 %v538
    %683 = vmatprep.mubr.bf16.mxu0 %v81
    %684 = vmatmul.mubr.bf16.gmra.mrb[0].mxu0 %v80
    %v685 = vpop.f32.mrb[0].mxu0
    %v686 = vadd.f32 %v262, %v685
    %v687 = vpop.f32.mrb[0].mxu0
    %v688 = vpop.f32.mrb[0].mxu0
    %v689 = vpop.f32.mrb[0].mxu0
    %690 = vdwg.mxu0
    %691 = vmatprep.subr.bf16.mxu0 0
    %692 = vmatpush1.bf16.msra.mxu0 %v539
    %693 = vmatprep.subr.bf16.mxu0 0
    %694 = vmatpush1.bf16.msra.mxu0 %v540
    %695 = vmatprep.subr.bf16.mxu0 0
    %696 = vmatpush1.bf16.msra.mxu0 %v541
    %697 = vmatprep.subr.bf16.mxu0 0
    %698 = vmatpush1.bf16.msra.mxu0 %v542
    %699 = vmatprep.subr.bf16.mxu0 0
    %700 = vmatpush1.bf16.msra.mxu0 %v543
    %701 = vmatprep.subr.bf16.mxu0 0
    %702 = vmatpush1.bf16.msra.mxu0 %v544
    %703 = vmatprep.subr.bf16.mxu0 0
    %704 = vmatpush1.bf16.msra.mxu0 %v545
    %705 = vmatprep.subr.bf16.mxu0 0
    %706 = vmatpush1.bf16.msra.mxu0 %v546
    %707 = vmatprep.subr.bf16.mxu0 0
    %708 = vmatpush1.bf16.msra.mxu0 %v547
    %709 = vmatprep.subr.bf16.mxu0 0
    %710 = vmatpush1.bf16.msra.mxu0 %v548
    %711 = vmatprep.subr.bf16.mxu0 0
    %712 = vmatpush1.bf16.msra.mxu0 %v549
    %713 = vmatprep.subr.bf16.mxu0 0
    %714 = vmatpush1.bf16.msra.mxu0 %v550
    %715 = vmatprep.subr.bf16.mxu0 0
    %716 = vmatpush1.bf16.msra.mxu0 %v551
    %717 = vmatprep.subr.bf16.mxu0 0
    %718 = vmatpush1.bf16.msra.mxu0 %v552
    %719 = vmatprep.subr.bf16.mxu0 0
    %720 = vmatpush1.bf16.msra.mxu0 %v553
    %721 = vmatprep.subr.bf16.mxu0 0
    %722 = vmatpush1.bf16.msra.mxu0 %v554
    %723 = vmatprep.mubr.bf16.mxu0 %v83
    %724 = vmatmul.mubr.bf16.gmra.mrb[0].mxu0 %v82
    %v725 = vpop.f32.mrb[0].mxu0
    %v726 = vadd.f32 %v686, %v725
    %v727 = vpop.f32.mrb[0].mxu0
    %v728 = vpop.f32.mrb[0].mxu0
    %v729 = vpop.f32.mrb[0].mxu0
    %730 = vdwg.mxu0
    %731 = vmatprep.subr.bf16.mxu0 0
    %732 = vmatpush1.bf16.msra.mxu0 %v555
    %733 = vmatprep.subr.bf16.mxu0 0
    %734 = vmatpush1.bf16.msra.mxu0 %v556
    %735 = vmatprep.subr.bf16.mxu0 0
    %736 = vmatpush1.bf16.msra.mxu0 %v557
    %737 = vmatprep.subr.bf16.mxu0 0
    %738 = vmatpush1.bf16.msra.mxu0 %v558
    %739 = vmatprep.subr.bf16.mxu0 0
    %740 = vmatpush1.bf16.msra.mxu0 %v559
    %741 = vmatprep.subr.bf16.mxu0 0
    %742 = vmatpush1.bf16.msra.mxu0 %v560
    %743 = vmatprep.subr.bf16.mxu0 0
    %744 = vmatpush1.bf16.msra.mxu0 %v561
    %745 = vmatprep.subr.bf16.mxu0 0
    %746 = vmatpush1.bf16.msra.mxu0 %v562
    %747 = vmatprep.subr.bf16.mxu0 0
    %748 = vmatpush1.bf16.msra.mxu0 %v563
    %749 = vmatprep.subr.bf16.mxu0 0
    %750 = vmatpush1.bf16.msra.mxu0 %v564
    %751 = vmatprep.subr.bf16.mxu0 0
    %752 = vmatpush1.bf16.msra.mxu0 %v565
    %753 = vmatprep.subr.bf16.mxu0 0
    %754 = vmatpush1.bf16.msra.mxu0 %v566
    %755 = vmatprep.subr.bf16.mxu0 0
    %756 = vmatpush1.bf16.msra.mxu0 %v567
    %757 = vmatprep.subr.bf16.mxu0 0
    %758 = vmatpush1.bf16.msra.mxu0 %v568
    %759 = vmatprep.subr.bf16.mxu0 0
    %760 = vmatpush1.bf16.msra.mxu0 %v569
    %761 = vmatprep.subr.bf16.mxu0 0
    %762 = vmatpush1.bf16.msra.mxu0 %v570
    %763 = vmatprep.mubr.bf16.mxu0 %v85
    %764 = vmatmul.mubr.bf16.gmra.mrb[0].mxu0 %v84
    %v765 = vpop.f32.mrb[0].mxu0
    %v766 = vadd.f32 %v726, %v765
    %v767 = vpop.f32.mrb[0].mxu0
    %v768 = vpop.f32.mrb[0].mxu0
    %v769 = vpop.f32.mrb[0].mxu0
    %770 = vdwg.mxu0
    %771 = vmatprep.subr.bf16.mxu0 0
    %772 = vmatpush1.bf16.msra.mxu0 %v571
    %773 = vmatprep.subr.bf16.mxu0 0
    %774 = vmatpush1.bf16.msra.mxu0 %v572
    %775 = vmatprep.subr.bf16.mxu0 0
    %776 = vmatpush1.bf16.msra.mxu0 %v573
    %777 = vmatprep.subr.bf16.mxu0 0
    %778 = vmatpush1.bf16.msra.mxu0 %v574
    %779 = vmatprep.subr.bf16.mxu0 0
    %780 = vmatpush1.bf16.msra.mxu0 %v575
    %781 = vmatprep.subr.bf16.mxu0 0
    %782 = vmatpush1.bf16.msra.mxu0 %v576
    %783 = vmatprep.subr.bf16.mxu0 0
    %784 = vmatpush1.bf16.msra.mxu0 %v577
    %785 = vmatprep.subr.bf16.mxu0 0
    %786 = vmatpush1.bf16.msra.mxu0 %v578
    %787 = vmatprep.subr.bf16.mxu0 0
    %788 = vmatpush1.bf16.msra.mxu0 %v579
    %789 = vmatprep.subr.bf16.mxu0 0
    %790 = vmatpush1.bf16.msra.mxu0 %v580
    %791 = vmatprep.subr.bf16.mxu0 0
    %792 = vmatpush1.bf16.msra.mxu0 %v581
    %793 = vmatprep.subr.bf16.mxu0 0
    %794 = vmatpush1.bf16.msra.mxu0 %v582
    %795 = vmatprep.subr.bf16.mxu0 0
    %796 = vmatpush1.bf16.msra.mxu0 %v583
    %797 = vmatprep.subr.bf16.mxu0 0
    %798 = vmatpush1.bf16.msra.mxu0 %v584
    %799 = vmatprep.subr.bf16.mxu0 0
    %800 = vmatpush1.bf16.msra.mxu0 %v585
    %801 = vmatprep.subr.bf16.mxu0 0
    %802 = vmatpush1.bf16.msra.mxu0 %v586
    %803 = vmatprep.mubr.bf16.mxu0 %v87
    %804 = vmatmul.mubr.bf16.gmra.mrb[0].mxu0 %v86
    %v805 = vpop.f32.mrb[0].mxu0
    %v806 = vadd.f32 %v766, %v805
    %v807 = vpop.f32.mrb[0].mxu0
    %v808 = vpop.f32.mrb[0].mxu0
    %v809 = vpop.f32.mrb[0].mxu0
    %810 = vdwg.mxu0
    %v811 = vld [vmem:[%s4] sm:$0x1]
    %v813 = vlaneseq
    %v814 = vshrl.u32 %v813, 7
    %v815 = vsub.s32 0, %v814
    %v816 = vrot.slane %v811, %v815
    %v818 = vadd.f32 %v806, %v816
    %v819 = vmax.f32 %v818, 0.0
    %v820 = vpack.c.bf16 %v819, %v819
    %v821 = vld [vmem:[%s5] sm:$0xf]
    %v822 = vld [vmem:[%s5 + $0x4] sm:$0xf]
    %v823 = vld [vmem:[%s5 + $0x8] sm:$0xf]
    %v824 = vld [vmem:[%s5 + $0xc] sm:$0xf]
    %v825 = vld [vmem:[%s6] sm:$0x1]
    %v827 = vlaneseq
    %v828 = vshrl.u32 %v827, 7
    %v829 = vsub.s32 0, %v828
    %v830 = vrot.slane %v825, %v829
    %v836 = vunpack.c.l.b16 %v821
    %v837 = vunpack.c.l.b16 %v822
    %v838 = vunpack.c.l.b16 %v823
    %v839 = vunpack.c.l.b16 %v824
    %v840 = vpack.c.b16 %v837, %v836
    %v841 = vpack.c.b16 %v839, %v838
    %vm844 = vcmask 261120
    %v846 = vsel %vm844, %v820, 0
    %848 = vmatprep.subr.bf16.mxu0 0
    %849 = vmatpush1.bf16.msra.mxu0 %v840
    %850 = vmatprep.subr.bf16.mxu0 0
    %851 = vmatpush1.bf16.msra.mxu0 %v841
    %852 = vmatprep.subr.bf16.mxu0 0
    %853 = vmatpush1.bf16.msra.mxu0 0
    %854 = vmatprep.subr.bf16.mxu0 0
    %855 = vmatpush1.bf16.msra.mxu0 0
    %856 = vmatprep.subr.bf16.mxu0 0
    %857 = vmatpush1.bf16.msra.mxu0 0
    %858 = vmatprep.subr.bf16.mxu0 0
    %859 = vmatpush1.bf16.msra.mxu0 0
    %860 = vmatprep.subr.bf16.mxu0 0
    %861 = vmatpush1.bf16.msra.mxu0 0
    %862 = vmatprep.subr.bf16.mxu0 0
    %863 = vmatpush1.bf16.msra.mxu0 0
    %864 = vmatprep.subr.bf16.mxu0 0
    %865 = vmatpush1.bf16.msra.mxu0 0
    %866 = vmatprep.subr.bf16.mxu0 0
    %867 = vmatpush1.bf16.msra.mxu0 0
    %868 = vmatprep.subr.bf16.mxu0 0
    %869 = vmatpush1.bf16.msra.mxu0 0
    %870 = vmatprep.subr.bf16.mxu0 0
    %871 = vmatpush1.bf16.msra.mxu0 0
    %872 = vmatprep.subr.bf16.mxu0 0
    %873 = vmatpush1.bf16.msra.mxu0 0
    %874 = vmatprep.subr.bf16.mxu0 0
    %875 = vmatpush1.bf16.msra.mxu0 0
    %876 = vmatprep.subr.bf16.mxu0 0
    %877 = vmatpush1.bf16.msra.mxu0 0
    %878 = vmatprep.subr.bf16.mxu0 0
    %879 = vmatpush1.bf16.msra.mxu0 0
    %880 = vmatprep.mubr.bf16.mxu0 0
    %881 = vmatmul.mubr.bf16.gmra.mrb[0].mxu0 %v846
    %v882 = vpop.f32.mrb[0].mxu0
    %v883 = vadd.f32 %v830, %v882
    %v884 = vpop.f32.mrb[0].mxu0
    %v885 = vpop.f32.mrb[0].mxu0
    %v886 = vpop.f32.mrb[0].mxu0
    %887 = vdwg.mxu0
    %v888 = vmax.f32 %v883, 0.0
    %v889 = vpack.c.bf16 %v888, %v888
    %v890 = vld [vmem:[%s7] sm:$0xf]
    %v891 = vld [vmem:[%s7 + $0x4] sm:$0xf]
    %v892 = vld [vmem:[%s7 + $0x8] sm:$0xf]
    %v893 = vld [vmem:[%s7 + $0xc] sm:$0xf]
    %v894 = vld [vmem:[%s8] sm:$0x1]
    %v896 = vlaneseq
    %v897 = vshrl.u32 %v896, 7
    %v898 = vsub.s32 0, %v897
    %v899 = vrot.slane %v894, %v898
    %v905 = vunpack.c.l.b16 %v890
    %v906 = vunpack.c.l.b16 %v891
    %v907 = vunpack.c.l.b16 %v892
    %v908 = vunpack.c.l.b16 %v893
    %v909 = vpack.c.b16 %v906, %v905
    %v910 = vpack.c.b16 %v908, %v907
    %v914 = vsel %vm844, %v889, 0
    %916 = vmatprep.subr.bf16.mxu0 0
    %917 = vmatpush1.bf16.msra.mxu0 %v909
    %918 = vmatprep.subr.bf16.mxu0 0
    %919 = vmatpush1.bf16.msra.mxu0 %v910
    %920 = vmatprep.subr.bf16.mxu0 0
    %921 = vmatpush1.bf16.msra.mxu0 0
    %922 = vmatprep.subr.bf16.mxu0 0
    %923 = vmatpush1.bf16.msra.mxu0 0
    %924 = vmatprep.subr.bf16.mxu0 0
    %925 = vmatpush1.bf16.msra.mxu0 0
    %926 = vmatprep.subr.bf16.mxu0 0
    %927 = vmatpush1.bf16.msra.mxu0 0
    %928 = vmatprep.subr.bf16.mxu0 0
    %929 = vmatpush1.bf16.msra.mxu0 0
    %930 = vmatprep.subr.bf16.mxu0 0
    %931 = vmatpush1.bf16.msra.mxu0 0
    %932 = vmatprep.subr.bf16.mxu0 0
    %933 = vmatpush1.bf16.msra.mxu0 0
    %934 = vmatprep.subr.bf16.mxu0 0
    %935 = vmatpush1.bf16.msra.mxu0 0
    %936 = vmatprep.subr.bf16.mxu0 0
    %937 = vmatpush1.bf16.msra.mxu0 0
    %938 = vmatprep.subr.bf16.mxu0 0
    %939 = vmatpush1.bf16.msra.mxu0 0
    %940 = vmatprep.subr.bf16.mxu0 0
    %941 = vmatpush1.bf16.msra.mxu0 0
    %942 = vmatprep.subr.bf16.mxu0 0
    %943 = vmatpush1.bf16.msra.mxu0 0
    %944 = vmatprep.subr.bf16.mxu0 0
    %945 = vmatpush1.bf16.msra.mxu0 0
    %946 = vmatprep.subr.bf16.mxu0 0
    %947 = vmatpush1.bf16.msra.mxu0 0
    %948 = vmatprep.mubr.bf16.mxu0 0
    %949 = vmatmul.mubr.bf16.gmra.mrb[0].mxu0 %v914
    %v950 = vpop.f32.mrb[0].mxu0
    %v951 = vadd.f32 %v899, %v950
    %v952 = vpop.f32.mrb[0].mxu0
    %v953 = vpop.f32.mrb[0].mxu0
    %v954 = vpop.f32.mrb[0].mxu0
    %955 = vdwg.mxu0
    %v956 = vtanh.pop %v951
    %vm957 = vcmask 25600
    %958 = vst.msk [vmem:[#allocation2] sm:$0x3] %vm957, %v956
    // Predicated region
    $region38: #{tpu_custom_call.1} parent=1 // pred_check
      _
    $region39: #{tpu_custom_call.1} parent=1 // pred_check_branch
      %960 = sbr.rel (0) target = $region41
    $region40: #{tpu_custom_call.1} parent=1 // pred_region
      %s962 = ssub.s32 32, 32
      %963 = vsyncadd [#allocation3], %s962
      %s965 = sshll.u32 [#allocation2], 4
      %s966 = int_to_ptr.vmem [resolvable:$true] %s965
      %968 = dma.vmem_to_hbm [thread:$0]  %s966, 32, %s9, [#allocation3]
    $region41: #{tpu_custom_call.1} parent=1 // pred_fallthru
      _
    // Predicated region
    $region42: #{tpu_custom_call.1} parent=1 // pred_check
      _
    $region43: #{tpu_custom_call.1} parent=1 // pred_check_branch
      %970 = sbr.rel (0) target = $region45
    $region44: #{tpu_custom_call.1} parent=1 // pred_region
      %971 = dma.done [#allocation3], 32
    $region45: #{tpu_custom_call.1} parent=1 // pred_fallthru
      _
    %972 = vsyncpa [#allocation3], 1

</llo_original>
